<compile_context>
chip_gen: v7x
topology: tpu7x:2x2x1
jax: 0.10.0
libtpu: 0.0.40
codegen_flags: <defaults>
</compile_context>

<pallas_src>
import functools

import jax
import jax.numpy as jnp
from jax.experimental import pallas as pl
from jax.experimental.pallas import tpu as pltpu


def _squeeze_block_kernel(x_ref, w1_ref, b1_ref, w2_ref, b2_ref, o_ref, *, inv_hw):
    x = x_ref[...]                                                      # (BT, C, HWp)

    # --- global average pool over the (zero-padded) spatial lane axis ---
    # Accumulate in f32; divide by the true H*W so padding is neutral.
    pooled = jnp.sum(x.astype(jnp.float32), axis=-1) * inv_hw           # (BT, C)

    # --- dense 1: Linear(C -> HID) + ReLU, via VPU multiply + XLU lane reduce ---
    w1 = w1_ref[...].astype(jnp.float32)                                # (HID, C)
    h = jnp.sum(pooled[:, None, :] * w1[None, :, :], axis=-1)           # (BT, HID)
    h = jnp.maximum(h + b1_ref[...], 0.0)                               # bias row (1, HID)

    # --- dense 2: Linear(HID -> C) + h_sigmoid ---
    w2 = w2_ref[...].astype(jnp.float32)                                # (C, HID)
    g = jnp.sum(h[:, None, :] * w2[None, :, :], axis=-1) + b2_ref[...]  # (BT, C)
    g = jnp.clip(g + 3.0, 0.0, 6.0) * (1.0 / 6.0)                       # relu6(x+3)/6

    # --- scale input: streaming multiply stays in the input dtype ---
    o_ref[...] = (g.astype(x.dtype)[:, :, None] * x).astype(o_ref.dtype)


def _choose_batch_tile(B, per_batch_bytes, target_bytes=2 * 1024 * 1024):
    """Largest batch fold that keeps blocks ~<=2 MiB and >=2 grid steps when possible."""
    bt = int(max(1, min(B, target_bytes // max(per_batch_bytes, 1))))
    if B >= 2 and B // bt < 2:
        bt = max(1, B // 2)          # keep both v7x TensorCores fed
    while B % bt:                    # exact divisor of B
        bt -= 1
    return bt


def squeeze_block(x, w1, b1, w2, b2):
    """x: [B, C, H, W]. Returns h_sigmoid(dense(avg_pool(x))) * x, same shape/dtype."""
    B, C, H, W = x.shape
    HW = H * W
    HID = w1.shape[0]
    itemsize = jnp.dtype(x.dtype).itemsize

    # Pad spatial axis up to a multiple of 128 (lane-dense loads/stores).
    HWp = ((HW + 127) // 128) * 128
    x_flat = x.reshape(B, C, HW)
    if HWp != HW:
        x_flat = jnp.pad(x_flat, ((0, 0), (0, 0), (0, HWp - HW)))

    # Biases as lane-dense rows.
    b1r = b1.reshape(1, HID).astype(jnp.float32)
    b2r = b2.reshape(1, C).astype(jnp.float32)

    BT = _choose_batch_tile(B, C * HWp * itemsize)
    grid = (B // BT,)

    block_bytes = BT * C * HWp * itemsize
    weight_bytes = 4 * int(w1.size + w2.size + b1.size + b2.size)
    # in + out blocks are double-buffered; weights are resident once.
    vmem_needed = 4 * block_bytes + 2 * weight_bytes + (1 << 20)
    vmem_limit = int(min(max(vmem_needed, 32 * 1024 * 1024), 64 * 1024 * 1024))

    cost = pl.CostEstimate(
        flops=2 * B * C * HWp + 4 * B * C * HID,
        transcendentals=0,
        bytes_accessed=2 * B * C * HWp * itemsize + weight_bytes,
    )

    kernel = functools.partial(_squeeze_block_kernel, inv_hw=1.0 / float(HW))

    out_flat = pl.pallas_call(
        kernel,
        out_shape=jax.ShapeDtypeStruct((B, C, HWp), x.dtype),
        grid_spec=pltpu.PrefetchScalarGridSpec(
            num_scalar_prefetch=0,
            grid=grid,
            in_specs=[
                pl.BlockSpec((BT, C, HWp), lambda b: (b, 0, 0)),   # x
                pl.BlockSpec((HID, C), lambda b: (0, 0)),          # W1 (torch layout)
                pl.BlockSpec((1, HID), lambda b: (0, 0)),          # b1 (lane-dense row)
                pl.BlockSpec((C, HID), lambda b: (0, 0)),          # W2 (torch layout)
                pl.BlockSpec((1, C), lambda b: (0, 0)),            # b2 (lane-dense row)
            ],
            out_specs=pl.BlockSpec((BT, C, HWp), lambda b: (b, 0, 0)),
        ),
        compiler_params=pltpu.CompilerParams(
            dimension_semantics=("parallel",),
            vmem_limit_bytes=vmem_limit,
        ),
        cost_estimate=cost,
    )(x_flat, w1, b1r, w2, b2r)

    if HWp != HW:
        out_flat = out_flat[:, :, :HW]
    return out_flat.reshape(B, C, H, W)


def squeeze_block_ref(x, w1, b1, w2, b2):
    """Plain-JAX reference matching the PyTorch forward."""
    pooled = jnp.mean(x, axis=(2, 3))                     # (B, C)
    h = jnp.maximum(pooled @ w1.T + b1, 0.0)              # (B, HID)
    g = h @ w2.T + b2                                     # (B, C)
    g = jnp.clip(g + 3.0, 0.0, 6.0) / 6.0                 # h_sigmoid
    return g[:, :, None, None] * x


if __name__ == "__main__":
    key = jax.random.PRNGKey(0)
    B, C, H, W = 2, 32, 16, 16
    divide = 4
    HID = C // divide

    kx, k1, k2, k3, k4 = jax.random.split(key, 5)
    x = jax.random.normal(kx, (B, C, H, W), dtype=jnp.float32)

    # Deterministic param init (torch Linear style: U(-1/sqrt(in), 1/sqrt(in)))
    bound1 = 1.0 / (C ** 0.5)
    w1 = jax.random.uniform(k1, (HID, C), jnp.float32, -bound1, bound1)
    b1 = jax.random.uniform(k2, (HID,), jnp.float32, -bound1, bound1)
    bound2 = 1.0 / (HID ** 0.5)
    w2 = jax.random.uniform(k3, (C, HID), jnp.float32, -bound2, bound2)
    b2 = jax.random.uniform(k4, (C,), jnp.float32, -bound2, bound2)

    out = squeeze_block(x, w1, b1, w2, b2)
    out = jax.block_until_ready(out)

    ref = squeeze_block_ref(x, w1, b1, w2, b2)
    assert out.shape == (B, C, H, W)
    assert jnp.allclose(out, ref, atol=1e-5, rtol=1e-5), "mismatch vs reference"

    print("KERNEL_OK")
</pallas_src>

<mosaic_0001>
module attributes {stable_mosaic.version = 11 : i64} {
  func.func @_squeeze_block_kernel(%arg0: i32, %arg1: memref<1x32x256xf32, #tpu.memory_space<vmem>>, %arg2: memref<8x32xf32, #tpu.memory_space<vmem>>, %arg3: memref<1x8xf32, #tpu.memory_space<vmem>>, %arg4: memref<32x8xf32, #tpu.memory_space<vmem>>, %arg5: memref<1x32xf32, #tpu.memory_space<vmem>>, %arg6: memref<1x32x256xf32, #tpu.memory_space<vmem>>) attributes {dimension_semantics = [#tpu.dimension_semantics<parallel>], iteration_bounds = array<i64: 2>, scalar_prefetch = 0 : i64, scratch_operands = 0 : i64, tpu.core_type = #tpu.core_type<tc>, window_params = [{transform_indices = @transform_0, window_bounds = array<i64: 1, 32, 256>}, {pipeline_mode = #tpu.pipeline_mode<synchronous>, transform_indices = @transform_1, window_bounds = array<i64: 8, 32>}, {pipeline_mode = #tpu.pipeline_mode<synchronous>, transform_indices = @transform_2, window_bounds = array<i64: 1, 8>}, {pipeline_mode = #tpu.pipeline_mode<synchronous>, transform_indices = @transform_3, window_bounds = array<i64: 32, 8>}, {pipeline_mode = #tpu.pipeline_mode<synchronous>, transform_indices = @transform_4, window_bounds = array<i64: 1, 32>}, {transform_indices = @transform_5, window_bounds = array<i64: 1, 32, 256>}]} {
    %c0 = arith.constant 0 : index
    %c0_0 = arith.constant 0 : index
    %c0_1 = arith.constant 0 : index
    %0 = vector.load %arg1[%c0, %c0_0, %c0_1] : memref<1x32x256xf32, #tpu.memory_space<vmem>>, vector<1x32x256xf32>
    %cst = arith.constant dense<0.000000e+00> : vector<1x32xf32>
    %1 = vector.multi_reduction <add>, %0, %cst [2] : vector<1x32x256xf32> to vector<1x32xf32>
    %cst_2 = arith.constant 3.906250e-03 : f32
    %2 = vector.broadcast %cst_2 : f32 to vector<1x32xf32>
    %3 = arith.mulf %1, %2 : vector<1x32xf32>
    %c0_3 = arith.constant 0 : index
    %c0_4 = arith.constant 0 : index
    %4 = vector.load %arg2[%c0_3, %c0_4] : memref<8x32xf32, #tpu.memory_space<vmem>>, vector<8x32xf32>
    %5 = vector.shape_cast %3 : vector<1x32xf32> to vector<1x1x32xf32>
    %6 = vector.shape_cast %4 : vector<8x32xf32> to vector<1x8x32xf32>
    %7 = vector.broadcast %5 : vector<1x1x32xf32> to vector<1x8x32xf32>
    %8 = arith.mulf %7, %6 : vector<1x8x32xf32>
    %cst_5 = arith.constant dense<0.000000e+00> : vector<1x8xf32>
    %9 = vector.multi_reduction <add>, %8, %cst_5 [2] : vector<1x8x32xf32> to vector<1x8xf32>
    %c0_6 = arith.constant 0 : index
    %c0_7 = arith.constant 0 : index
    %10 = vector.load %arg3[%c0_6, %c0_7] : memref<1x8xf32, #tpu.memory_space<vmem>>, vector<1x8xf32>
    %11 = arith.addf %9, %10 : vector<1x8xf32>
    %cst_8 = arith.constant 0.000000e+00 : f32
    %12 = vector.broadcast %cst_8 : f32 to vector<1x8xf32>
    %13 = arith.maximumf %11, %12 : vector<1x8xf32>
    %c0_9 = arith.constant 0 : index
    %c0_10 = arith.constant 0 : index
    %14 = vector.load %arg4[%c0_9, %c0_10] : memref<32x8xf32, #tpu.memory_space<vmem>>, vector<32x8xf32>
    %15 = vector.shape_cast %13 : vector<1x8xf32> to vector<1x1x8xf32>
    %16 = vector.shape_cast %14 : vector<32x8xf32> to vector<1x32x8xf32>
    %17 = vector.broadcast %15 : vector<1x1x8xf32> to vector<1x32x8xf32>
    %18 = arith.mulf %17, %16 : vector<1x32x8xf32>
    %cst_11 = arith.constant dense<0.000000e+00> : vector<1x32xf32>
    %19 = vector.multi_reduction <add>, %18, %cst_11 [2] : vector<1x32x8xf32> to vector<1x32xf32>
    %c0_12 = arith.constant 0 : index
    %c0_13 = arith.constant 0 : index
    %20 = vector.load %arg5[%c0_12, %c0_13] : memref<1x32xf32, #tpu.memory_space<vmem>>, vector<1x32xf32>
    %21 = arith.addf %19, %20 : vector<1x32xf32>
    %cst_14 = arith.constant 3.000000e+00 : f32
    %22 = vector.broadcast %cst_14 : f32 to vector<1x32xf32>
    %23 = arith.addf %21, %22 : vector<1x32xf32>
    %cst_15 = arith.constant 0.000000e+00 : f32
    %cst_16 = arith.constant 6.000000e+00 : f32
    %24 = vector.broadcast %cst_15 : f32 to vector<1x32xf32>
    %25 = arith.maximumf %24, %23 : vector<1x32xf32>
    %26 = vector.broadcast %cst_16 : f32 to vector<1x32xf32>
    %27 = arith.minimumf %26, %25 : vector<1x32xf32>
    %cst_17 = arith.constant 0.166666672 : f32
    %28 = vector.broadcast %cst_17 : f32 to vector<1x32xf32>
    %29 = arith.mulf %27, %28 : vector<1x32xf32>
    %30 = vector.shape_cast %29 : vector<1x32xf32> to vector<1x32x1xf32>
    %31 = vector.broadcast %30 : vector<1x32x1xf32> to vector<1x32x256xf32>
    %32 = arith.mulf %31, %0 : vector<1x32x256xf32>
    %c0_18 = arith.constant 0 : index
    %c0_19 = arith.constant 0 : index
    %c0_20 = arith.constant 0 : index
    %33 = vector.load %arg6[%c0_18, %c0_19, %c0_20] : memref<1x32x256xf32, #tpu.memory_space<vmem>>, vector<1x32x256xf32>
    tpu.vector_store %arg6[%c0_18, %c0_19, %c0_20], %32 {strides = array<i32>} : memref<1x32x256xf32, #tpu.memory_space<vmem>>, vector<1x32x256xf32>,
    return
  }
  func.func @transform_0(%arg0: i32) -> (i32, i32, i32) {
    %c0_i32 = arith.constant 0 : i32
    %c0_i32_0 = arith.constant 0 : i32
    %c0_i32_1 = arith.constant 0 : i32
    return %arg0, %c0_i32, %c0_i32_0 : i32, i32, i32
  }
  func.func @transform_1(%arg0: i32) -> (i32, i32) {
    %c0_i32 = arith.constant 0 : i32
    %c0_i32_0 = arith.constant 0 : i32
    %c0_i32_1 = arith.constant 0 : i32
    return %c0_i32, %c0_i32_0 : i32, i32
  }
  func.func @transform_2(%arg0: i32) -> (i32, i32) {
    %c0_i32 = arith.constant 0 : i32
    %c0_i32_0 = arith.constant 0 : i32
    %c0_i32_1 = arith.constant 0 : i32
    return %c0_i32, %c0_i32_0 : i32, i32
  }
  func.func @transform_3(%arg0: i32) -> (i32, i32) {
    %c0_i32 = arith.constant 0 : i32
    %c0_i32_0 = arith.constant 0 : i32
    %c0_i32_1 = arith.constant 0 : i32
    return %c0_i32, %c0_i32_0 : i32, i32
  }
  func.func @transform_4(%arg0: i32) -> (i32, i32) {
    %c0_i32 = arith.constant 0 : i32
    %c0_i32_0 = arith.constant 0 : i32
    %c0_i32_1 = arith.constant 0 : i32
    return %c0_i32, %c0_i32_0 : i32, i32
  }
  func.func @transform_5(%arg0: i32) -> (i32, i32, i32) {
    %c0_i32 = arith.constant 0 : i32
    %c0_i32_0 = arith.constant 0 : i32
    %c0_i32_1 = arith.constant 0 : i32
    return %arg0, %c0_i32, %c0_i32_0 : i32, i32, i32
  }
}

</mosaic_0001>

<llo_original>
// kernel: tpu_custom_call.1
$region0: #{tpu_custom_call.1}
  #allocation0 [shape = 'u32[]', space=smem, size = 0x4, offset = 0x4, fixed_abs, tag = 'smem constant byte address 0x4 - core index']
  #allocation1 [shape = 'u32[144,128]{1,0:T(1,128)}', space=vmem, size = 0x12000, scoped, tag = 'internal scratch']
  %s0 = inlined_call_operand.hbm [shape: f32[2,32,256], index: 0, kind: input, shape index: {}]
  %s1 = inlined_call_operand.vmem [shape: f32[8,32], index: 1, kind: input, shape index: {}]
  %s2 = inlined_call_operand.vmem [shape: f32[1,8], index: 2, kind: input, shape index: {}]
  %s3 = inlined_call_operand.vmem [shape: f32[32,8], index: 3, kind: input, shape index: {}]
  %s4 = inlined_call_operand.vmem [shape: f32[1,32], index: 4, kind: input, shape index: {}]
  %s5 = inlined_call_operand.hbm [shape: f32[2,32,256], index: 5, kind: output, shape index: {}]
  %s6 = sld [smem:[#allocation0]]
  $region57: #{tpu_custom_call.1} parent=0
    _
  %s8 = ssub.s32 1, %s6
  %s9 = scalar_select 0, %s8, %s6
  $region1: #{tpu_custom_call.1} parent=0
    #allocation2 [shape = 'u8[65536]{0}', space=vmem, size = 0x10000, scoped, tag = 'input window, operand 0']
    #allocation3 [shape = 's32[2]{0}', space=sflag, size = 0x8, scoped, tag = 'scoped memory for tpu_custom_call.1']
    #allocation4 [shape = 's32[2]{0}', space=sflag, size = 0x8, scoped, tag = 'scoped memory for tpu_custom_call.1']
    #allocation5 [shape = 'u8[65536]{0}', space=vmem, size = 0x10000, scoped, tag = 'output window, operand 0']
    %10 = vsyncpa [#allocation3], 0
    %s11 = scalar_lea.sflag [#allocation3], 1
    %12 = vsyncpa %s11, 0
    %13 = vsyncpa [#allocation4], 0
    %s14 = scalar_lea.sflag [#allocation4], 1
    %15 = vsyncpa %s14, 0
    loop: start=0, step=1, limit=4
    $region2: #{tpu_custom_call.1} parent=1 // loop_pre_header
      _
    $region3: #{tpu_custom_call.1} parent=1 // loop_header
      %s17 = sphi 0, %s21
      %p18 = scmp.ge.s32.totalorder %s17, 4
      %s27 = sphi 0, %s29
      %s30 = sphi 0, %s27
      %s31 = sphi 0, %s30
      %s47 = sphi 0, %s31
      %s51 = sphi 0, %s51
      %s53 = sphi 0, %s51
      %s54 = sphi 0, %s53
      %s68 = sphi 0, %s54
      %s72 = sphi 0, %s72
      %s74 = sphi 0, %s72
      %s75 = sphi 0, %s74
      %s89 = sphi 0, %s75
      %s93 = sphi 0, %s93
      %s95 = sphi 0, %s93
      %s96 = sphi 0, %s95
      %s110 = sphi 0, %s96
      %s114 = sphi 0, %s114
      %s116 = sphi 0, %s114
      %s117 = sphi 0, %s116
      %s131 = sphi 0, %s117
      %s137 = sphi 0, %s139
      %s140 = sphi 0, %s137
      %s141 = sphi 0, %s140
      %s157 = sphi 0, %s141
    $region4: #{tpu_custom_call.1} parent=1 // loop_header_branch
      %20 = sbr.rel (%p18) target = $region8
    $region5: #{tpu_custom_call.1} parent=1 // loop_body
      %s22 = ssub.s32 %s17, 1
      %s23 = ssub.s32 %s17, 2
      %s24 = sadd.s32 %s17, 1
      %s25 = ssub.s32 %s17, %s24
      %p26 = scmp.eq.s32.totalorder %s25, 0
      %s28 = sadd.s32 %s27, 1
      %s29 = scalar_select %p26, %s27, %s28
      %p32 = pneg %p26
      %p33 = scmp.eq.s32.totalorder %s17, 1
      %p34 = por %p32, %p33
      %p35 = scmp.ne.s32.totalorder %s27, %s30
      %p36 = scmp.eq.s32.totalorder %s17, 0
      %p37 = por %p35, %p36
      %p38 = scmp.ne.s32.totalorder %s27, %s30
      %p39 = scmp.eq.s32.totalorder %s22, 1
      %p40 = por %p38, %p39
      %p41 = scmp.ne.s32.totalorder %s30, %s31
      %p42 = scmp.eq.s32.totalorder %s22, 0
      %p43 = por %p41, %p42
      %p44 = scmp.ne.s32.totalorder %s30, %s31
      %p45 = scmp.eq.s32.totalorder %s23, 1
      %p46 = por %p44, %p45
      %p48 = scmp.ne.s32.totalorder %s31, %s47
      %p49 = scmp.eq.s32.totalorder %s23, 0
      %p50 = por %p48, %p49
      %s52 = sadd.s32 %s51, 1
      %p55 = scmp.eq.s32.totalorder %s17, 1
      %p56 = scmp.ne.s32.totalorder %s51, %s53
      %p57 = scmp.eq.s32.totalorder %s17, 0
      %p58 = por %p56, %p57
      %p59 = scmp.ne.s32.totalorder %s51, %s53
      %p60 = scmp.eq.s32.totalorder %s22, 1
      %p61 = por %p59, %p60
      %p62 = scmp.ne.s32.totalorder %s53, %s54
      %p63 = scmp.eq.s32.totalorder %s22, 0
      %p64 = por %p62, %p63
      %p65 = scmp.ne.s32.totalorder %s53, %s54
      %p66 = scmp.eq.s32.totalorder %s23, 1
      %p67 = por %p65, %p66
      %p69 = scmp.ne.s32.totalorder %s54, %s68
      %p70 = scmp.eq.s32.totalorder %s23, 0
      %p71 = por %p69, %p70
      %s73 = sadd.s32 %s72, 1
      %p76 = scmp.eq.s32.totalorder %s17, 1
      %p77 = scmp.ne.s32.totalorder %s72, %s74
      %p78 = scmp.eq.s32.totalorder %s17, 0
      %p79 = por %p77, %p78
      %p80 = scmp.ne.s32.totalorder %s72, %s74
      %p81 = scmp.eq.s32.totalorder %s22, 1
      %p82 = por %p80, %p81
      %p83 = scmp.ne.s32.totalorder %s74, %s75
      %p84 = scmp.eq.s32.totalorder %s22, 0
      %p85 = por %p83, %p84
      %p86 = scmp.ne.s32.totalorder %s74, %s75
      %p87 = scmp.eq.s32.totalorder %s23, 1
      %p88 = por %p86, %p87
      %p90 = scmp.ne.s32.totalorder %s75, %s89
      %p91 = scmp.eq.s32.totalorder %s23, 0
      %p92 = por %p90, %p91
      %s94 = sadd.s32 %s93, 1
      %p97 = scmp.eq.s32.totalorder %s17, 1
      %p98 = scmp.ne.s32.totalorder %s93, %s95
      %p99 = scmp.eq.s32.totalorder %s17, 0
      %p100 = por %p98, %p99
      %p101 = scmp.ne.s32.totalorder %s93, %s95
      %p102 = scmp.eq.s32.totalorder %s22, 1
      %p103 = por %p101, %p102
      %p104 = scmp.ne.s32.totalorder %s95, %s96
      %p105 = scmp.eq.s32.totalorder %s22, 0
      %p106 = por %p104, %p105
      %p107 = scmp.ne.s32.totalorder %s95, %s96
      %p108 = scmp.eq.s32.totalorder %s23, 1
      %p109 = por %p107, %p108
      %p111 = scmp.ne.s32.totalorder %s96, %s110
      %p112 = scmp.eq.s32.totalorder %s23, 0
      %p113 = por %p111, %p112
      %s115 = sadd.s32 %s114, 1
      %p118 = scmp.eq.s32.totalorder %s17, 1
      %p119 = scmp.ne.s32.totalorder %s114, %s116
      %p120 = scmp.eq.s32.totalorder %s17, 0
      %p121 = por %p119, %p120
      %p122 = scmp.ne.s32.totalorder %s114, %s116
      %p123 = scmp.eq.s32.totalorder %s22, 1
      %p124 = por %p122, %p123
      %p125 = scmp.ne.s32.totalorder %s116, %s117
      %p126 = scmp.eq.s32.totalorder %s22, 0
      %p127 = por %p125, %p126
      %p128 = scmp.ne.s32.totalorder %s116, %s117
      %p129 = scmp.eq.s32.totalorder %s23, 1
      %p130 = por %p128, %p129
      %p132 = scmp.ne.s32.totalorder %s117, %s131
      %p133 = scmp.eq.s32.totalorder %s23, 0
      %p134 = por %p132, %p133
      %s135 = ssub.s32 %s17, %s24
      %p136 = scmp.eq.s32.totalorder %s135, 0
      %s138 = sadd.s32 %s137, 1
      %s139 = scalar_select %p136, %s137, %s138
      %p142 = pneg %p136
      %p143 = scmp.eq.s32.totalorder %s17, 1
      %p144 = por %p142, %p143
      %p145 = scmp.ne.s32.totalorder %s137, %s140
      %p146 = scmp.eq.s32.totalorder %s17, 0
      %p147 = por %p145, %p146
      %p148 = scmp.ne.s32.totalorder %s137, %s140
      %p149 = scmp.eq.s32.totalorder %s22, 1
      %p150 = por %p148, %p149
      %p151 = scmp.ne.s32.totalorder %s140, %s141
      %p152 = scmp.eq.s32.totalorder %s22, 0
      %p153 = por %p151, %p152
      %p154 = scmp.ne.s32.totalorder %s140, %s141
      %p155 = scmp.eq.s32.totalorder %s23, 1
      %p156 = por %p154, %p155
      %p158 = scmp.ne.s32.totalorder %s141, %s157
      %p159 = scmp.eq.s32.totalorder %s23, 0
      %p160 = por %p158, %p159
      %p161 = scmp.le.s32.totalorder 1, %s17
      %p162 = scmp.lt.s32.totalorder %s17, 3
      %p163 = pnand %p161, %p162
      %p164 = pneg %p163
      // Predicated region
      $region9: #{tpu_custom_call.1} parent=5 // pred_check
        _
      $region10: #{tpu_custom_call.1} parent=5 // pred_check_branch
        %166 = sbr.rel (%p163) target = $region12
      $region11: #{tpu_custom_call.1} parent=5 // pred_region
        %s167 = ssub.s32 %s17, 1
        // Predicated region
        $region13: #{tpu_custom_call.1} parent=11 // pred_check
          %p168 = pneg %p64
        $region14: #{tpu_custom_call.1} parent=11 // pred_check_branch
          %170 = sbr.rel (%p168) target = $region16
        $region15: #{tpu_custom_call.1} parent=11 // pred_region
          _
        $region16: #{tpu_custom_call.1} parent=11 // pred_fallthru
          _
        // Predicated region
        $region17: #{tpu_custom_call.1} parent=11 // pred_check
          %p171 = pneg %p85
        $region18: #{tpu_custom_call.1} parent=11 // pred_check_branch
          %173 = sbr.rel (%p171) target = $region20
        $region19: #{tpu_custom_call.1} parent=11 // pred_region
          _
        $region20: #{tpu_custom_call.1} parent=11 // pred_fallthru
          _
        // Predicated region
        $region21: #{tpu_custom_call.1} parent=11 // pred_check
          %p174 = pneg %p106
        $region22: #{tpu_custom_call.1} parent=11 // pred_check_branch
          %176 = sbr.rel (%p174) target = $region24
        $region23: #{tpu_custom_call.1} parent=11 // pred_region
          _
        $region24: #{tpu_custom_call.1} parent=11 // pred_fallthru
          _
        // Predicated region
        $region25: #{tpu_custom_call.1} parent=11 // pred_check
          %p177 = pneg %p127
        $region26: #{tpu_custom_call.1} parent=11 // pred_check_branch
          %179 = sbr.rel (%p177) target = $region28
        $region27: #{tpu_custom_call.1} parent=11 // pred_region
          _
        $region28: #{tpu_custom_call.1} parent=11 // pred_fallthru
          _
      $region12: #{tpu_custom_call.1} parent=5 // pred_fallthru
        _
      %p180 = scmp.lt.s32.totalorder %s17, 2
      // Predicated region
      $region29: #{tpu_custom_call.1} parent=5 // pred_check
        %p181 = pneg %p180
      $region30: #{tpu_custom_call.1} parent=5 // pred_check_branch
        %183 = sbr.rel (%p181) target = $region32
      $region31: #{tpu_custom_call.1} parent=5 // pred_region
        // Predicated region
        $region33: #{tpu_custom_call.1} parent=31 // pred_check
          %p184 = pneg %p37
        $region34: #{tpu_custom_call.1} parent=31 // pred_check_branch
          %186 = sbr.rel (%p184) target = $region36
        $region35: #{tpu_custom_call.1} parent=31 // pred_region
          %s187 = sand.u32 %s27, 1
          %s188 = scalar_lea.sflag [#allocation3], %s187
          %s189 = sand.u32 %s27, 1
          %s190 = smul.addr %s189, 64
          %s191 = scalar_lea.vmem [#allocation2], %s190
          %s193 = ssub.s32 1024, 1024
          %194 = vsyncadd %s188, %s193
          %s195 = smul.addr %s17, 8
          %s196 = smul.addr %s195, 128
          %s197 = scalar_lea.hbm %s0, %s196
          %s198 = sshll.u32 %s191, 4
          %s199 = int_to_ptr.vmem [resolvable:$true] %s198
          %204 = dma.hbm_to_vmem [thread:$0]  %s197, 1024, %s199, %s188, 256, 256, 16
        $region36: #{tpu_custom_call.1} parent=31 // pred_fallthru
          _
      $region32: #{tpu_custom_call.1} parent=5 // pred_fallthru
        _
      %p205 = scmp.le.s32.totalorder 1, %s17
      %p206 = scmp.lt.s32.totalorder %s17, 3
      %p207 = pnand %p205, %p206
      %p208 = pneg %p207
      // Predicated region
      $region37: #{tpu_custom_call.1} parent=5 // pred_check
        _
      $region38: #{tpu_custom_call.1} parent=5 // pred_check_branch
        %210 = sbr.rel (%p207) target = $region40
      $region39: #{tpu_custom_call.1} parent=5 // pred_region
        %s211 = ssub.s32 %s17, 1
        %s212 = sand.u32 %s30, 1
        %s213 = scalar_lea.sflag [#allocation3], %s212
        %s214 = sand.u32 %s30, 1
        %s215 = smul.addr %s214, 64
        %s216 = scalar_lea.vmem [#allocation2], %s215
        // Predicated region
        $region41: #{tpu_custom_call.1} parent=39 // pred_check
          %p217 = pneg %p43
        $region42: #{tpu_custom_call.1} parent=39 // pred_check_branch
          %219 = sbr.rel (%p217) target = $region44
        $region43: #{tpu_custom_call.1} parent=39 // pred_region
          %220 = dma.done %s213, 1024
        $region44: #{tpu_custom_call.1} parent=39 // pred_fallthru
          _
        %s221 = sand.u32 %s30, 1
        %s222 = scalar_lea.sflag [#allocation3], %s221
        %s223 = sand.u32 %s30, 1
        %s224 = smul.addr %s223, 64
        %s225 = scalar_lea.vmem [#allocation2], %s224
        %p226 = pneg %p43
        %p227 = pneg %p40
        %p228 = pneg %p64
        %p229 = pneg %p61
        %p230 = pneg %p85
        %p231 = pneg %p82
        %p232 = pneg %p106
        %p233 = pneg %p103
        %p234 = pneg %p127
        %p235 = pneg %p124
        %p236 = pneg %p153
        %p237 = pneg %p150
        %s238 = sand.u32 %s140, 1
        %s239 = scalar_lea.sflag [#allocation4], %s238
        %s240 = sand.u32 %s140, 1
        %s241 = smul.addr %s240, 64
        %s242 = scalar_lea.vmem [#allocation5], %s241
        %v243 = vld [vmem:[%s216] sm:$0xff]
        %v244 = vld [vmem:[%s216 + $0x8] sm:$0xff]
        %v245 = vld [vmem:[%s216 + $0x10] sm:$0xff]
        %v246 = vld [vmem:[%s216 + $0x18] sm:$0xff]
        %v247 = vld [vmem:[%s216 + $0x20] sm:$0xff]
        %v248 = vld [vmem:[%s216 + $0x28] sm:$0xff]
        %v249 = vld [vmem:[%s216 + $0x30] sm:$0xff]
        %v250 = vld [vmem:[%s216 + $0x38] sm:$0xff]
        %v251 = vadd.f32 %v243, %v244
        %252 = vadd.xlane.f32.xlu0 %v251
        %v253 = vpop.xlane.xlu0 %252
        %v254 = vadd.f32 %v245, %v246
        %255 = vadd.xlane.f32.xlu0 %v254
        %v256 = vpop.xlane.xlu0 %255
        %v257 = vadd.f32 %v247, %v248
        %258 = vadd.xlane.f32.xlu0 %v257
        %v259 = vpop.xlane.xlu0 %258
        %v260 = vadd.f32 %v249, %v250
        %261 = vadd.xlane.f32.xlu0 %v260
        %v262 = vpop.xlane.xlu0 %261
        %v263 = vmul.f32 %v253, 0.00390625
        %v264 = vmul.f32 %v256, 0.00390625
        %v265 = vmul.f32 %v259, 0.00390625
        %v266 = vmul.f32 %v262, 0.00390625
        %v267 = vld [vmem:[%s1] sm:$0xff]
        %v269 = vlaneseq
        %v270 = vshrl.u32 %v269, 7
        %v271 = vsub.s32 0, %v270
        %v272 = vrot.slane %v267, %v271
        %274 = vbcast.lane.b32.xlu0 %v272, 256
        %v275 = vpop.permute.xlu0 %274
        %s277 = sor.u32 256, 8
        %278 = vbcast.lane.b32.xlu0 %v272, %s277
        %v279 = vpop.permute.xlu0 %278
        %s281 = sor.u32 256, 16
        %282 = vbcast.lane.b32.xlu0 %v272, %s281
        %v283 = vpop.permute.xlu0 %282
        %s285 = sor.u32 256, 24
        %286 = vbcast.lane.b32.xlu0 %v272, %s285
        %v287 = vpop.permute.xlu0 %286
        %v288 = vlaneseq
        %v289 = vshrl.u32 %v288, 7
        %v290 = vsub.s32 1, %v289
        %v291 = vrot.slane %v267, %v290
        %293 = vbcast.lane.b32.xlu0 %v291, 256
        %v294 = vpop.permute.xlu0 %293
        %s296 = sor.u32 256, 8
        %297 = vbcast.lane.b32.xlu0 %v291, %s296
        %v298 = vpop.permute.xlu0 %297
        %s300 = sor.u32 256, 16
        %301 = vbcast.lane.b32.xlu0 %v291, %s300
        %v302 = vpop.permute.xlu0 %301
        %s304 = sor.u32 256, 24
        %305 = vbcast.lane.b32.xlu0 %v291, %s304
        %v306 = vpop.permute.xlu0 %305
        %v307 = vlaneseq
        %v308 = vshrl.u32 %v307, 7
        %v309 = vsub.s32 2, %v308
        %v310 = vrot.slane %v267, %v309
        %312 = vbcast.lane.b32.xlu0 %v310, 256
        %v313 = vpop.permute.xlu0 %312
        %s315 = sor.u32 256, 8
        %316 = vbcast.lane.b32.xlu0 %v310, %s315
        %v317 = vpop.permute.xlu0 %316
        %s319 = sor.u32 256, 16
        %320 = vbcast.lane.b32.xlu0 %v310, %s319
        %v321 = vpop.permute.xlu0 %320
        %s323 = sor.u32 256, 24
        %324 = vbcast.lane.b32.xlu0 %v310, %s323
        %v325 = vpop.permute.xlu0 %324
        %v326 = vlaneseq
        %v327 = vshrl.u32 %v326, 7
        %v328 = vsub.s32 3, %v327
        %v329 = vrot.slane %v267, %v328
        %331 = vbcast.lane.b32.xlu0 %v329, 256
        %v332 = vpop.permute.xlu0 %331
        %s334 = sor.u32 256, 8
        %335 = vbcast.lane.b32.xlu0 %v329, %s334
        %v336 = vpop.permute.xlu0 %335
        %s338 = sor.u32 256, 16
        %339 = vbcast.lane.b32.xlu0 %v329, %s338
        %v340 = vpop.permute.xlu0 %339
        %s342 = sor.u32 256, 24
        %343 = vbcast.lane.b32.xlu0 %v329, %s342
        %v344 = vpop.permute.xlu0 %343
        %v345 = vlaneseq
        %v346 = vshrl.u32 %v345, 7
        %v347 = vsub.s32 4, %v346
        %v348 = vrot.slane %v267, %v347
        %350 = vbcast.lane.b32.xlu0 %v348, 256
        %v351 = vpop.permute.xlu0 %350
        %s353 = sor.u32 256, 8
        %354 = vbcast.lane.b32.xlu0 %v348, %s353
        %v355 = vpop.permute.xlu0 %354
        %s357 = sor.u32 256, 16
        %358 = vbcast.lane.b32.xlu0 %v348, %s357
        %v359 = vpop.permute.xlu0 %358
        %s361 = sor.u32 256, 24
        %362 = vbcast.lane.b32.xlu0 %v348, %s361
        %v363 = vpop.permute.xlu0 %362
        %v364 = vlaneseq
        %v365 = vshrl.u32 %v364, 7
        %v366 = vsub.s32 5, %v365
        %v367 = vrot.slane %v267, %v366
        %369 = vbcast.lane.b32.xlu0 %v367, 256
        %v370 = vpop.permute.xlu0 %369
        %s372 = sor.u32 256, 8
        %373 = vbcast.lane.b32.xlu0 %v367, %s372
        %v374 = vpop.permute.xlu0 %373
        %s376 = sor.u32 256, 16
        %377 = vbcast.lane.b32.xlu0 %v367, %s376
        %v378 = vpop.permute.xlu0 %377
        %s380 = sor.u32 256, 24
        %381 = vbcast.lane.b32.xlu0 %v367, %s380
        %v382 = vpop.permute.xlu0 %381
        %v383 = vlaneseq
        %v384 = vshrl.u32 %v383, 7
        %v385 = vsub.s32 6, %v384
        %v386 = vrot.slane %v267, %v385
        %388 = vbcast.lane.b32.xlu0 %v386, 256
        %v389 = vpop.permute.xlu0 %388
        %s391 = sor.u32 256, 8
        %392 = vbcast.lane.b32.xlu0 %v386, %s391
        %v393 = vpop.permute.xlu0 %392
        %s395 = sor.u32 256, 16
        %396 = vbcast.lane.b32.xlu0 %v386, %s395
        %v397 = vpop.permute.xlu0 %396
        %s399 = sor.u32 256, 24
        %400 = vbcast.lane.b32.xlu0 %v386, %s399
        %v401 = vpop.permute.xlu0 %400
        %v402 = vlaneseq
        %v403 = vshrl.u32 %v402, 7
        %v404 = vsub.s32 7, %v403
        %v405 = vrot.slane %v267, %v404
        %407 = vbcast.lane.b32.xlu0 %v405, 256
        %v408 = vpop.permute.xlu0 %407
        %s410 = sor.u32 256, 8
        %411 = vbcast.lane.b32.xlu0 %v405, %s410
        %v412 = vpop.permute.xlu0 %411
        %s414 = sor.u32 256, 16
        %415 = vbcast.lane.b32.xlu0 %v405, %s414
        %v416 = vpop.permute.xlu0 %415
        %s418 = sor.u32 256, 24
        %419 = vbcast.lane.b32.xlu0 %v405, %s418
        %v420 = vpop.permute.xlu0 %419
        %v453 = vmul.f32 %v263, %v275
        %v454 = vmul.f32 %v264, %v279
        %v455 = vmul.f32 %v265, %v283
        %v456 = vmul.f32 %v266, %v287
        %v457 = vmul.f32 %v263, %v294
        %v458 = vmul.f32 %v264, %v298
        %v459 = vmul.f32 %v265, %v302
        %v460 = vmul.f32 %v266, %v306
        %v461 = vmul.f32 %v263, %v313
        %v462 = vmul.f32 %v264, %v317
        %v463 = vmul.f32 %v265, %v321
        %v464 = vmul.f32 %v266, %v325
        %v465 = vmul.f32 %v263, %v332
        %v466 = vmul.f32 %v264, %v336
        %v467 = vmul.f32 %v265, %v340
        %v468 = vmul.f32 %v266, %v344
        %v469 = vmul.f32 %v263, %v351
        %v470 = vmul.f32 %v264, %v355
        %v471 = vmul.f32 %v265, %v359
        %v472 = vmul.f32 %v266, %v363
        %v473 = vmul.f32 %v263, %v370
        %v474 = vmul.f32 %v264, %v374
        %v475 = vmul.f32 %v265, %v378
        %v476 = vmul.f32 %v266, %v382
        %v477 = vmul.f32 %v263, %v389
        %v478 = vmul.f32 %v264, %v393
        %v479 = vmul.f32 %v265, %v397
        %v480 = vmul.f32 %v266, %v401
        %v481 = vmul.f32 %v263, %v408
        %v482 = vmul.f32 %v264, %v412
        %v483 = vmul.f32 %v265, %v416
        %v484 = vmul.f32 %v266, %v420
        %517 = vset.pattern.permute.xlu0 0
        %518 = vperm.xlu0 %517, %v453
        %v519 = vpop.permute.xlu0 %518
        %520 = vset.pattern.permute.xlu0 0
        %521 = vperm.xlu0 %520, %v454
        %v522 = vpop.permute.xlu0 %521
        %523 = vset.pattern.permute.xlu0 0
        %524 = vperm.xlu0 %523, %v455
        %v525 = vpop.permute.xlu0 %524
        %526 = vset.pattern.permute.xlu0 0
        %527 = vperm.xlu0 %526, %v456
        %v528 = vpop.permute.xlu0 %527
        %529 = vset.pattern.permute.xlu0 0
        %530 = vperm.xlu0 %529, %v457
        %v531 = vpop.permute.xlu0 %530
        %532 = vset.pattern.permute.xlu0 0
        %533 = vperm.xlu0 %532, %v458
        %v534 = vpop.permute.xlu0 %533
        %535 = vset.pattern.permute.xlu0 0
        %536 = vperm.xlu0 %535, %v459
        %v537 = vpop.permute.xlu0 %536
        %538 = vset.pattern.permute.xlu0 0
        %539 = vperm.xlu0 %538, %v460
        %v540 = vpop.permute.xlu0 %539
        %541 = vset.pattern.permute.xlu0 0
        %542 = vperm.xlu0 %541, %v461
        %v543 = vpop.permute.xlu0 %542
        %544 = vset.pattern.permute.xlu0 0
        %545 = vperm.xlu0 %544, %v462
        %v546 = vpop.permute.xlu0 %545
        %547 = vset.pattern.permute.xlu0 0
        %548 = vperm.xlu0 %547, %v463
        %v549 = vpop.permute.xlu0 %548
        %550 = vset.pattern.permute.xlu0 0
        %551 = vperm.xlu0 %550, %v464
        %v552 = vpop.permute.xlu0 %551
        %553 = vset.pattern.permute.xlu0 0
        %554 = vperm.xlu0 %553, %v465
        %v555 = vpop.permute.xlu0 %554
        %556 = vset.pattern.permute.xlu0 0
        %557 = vperm.xlu0 %556, %v466
        %v558 = vpop.permute.xlu0 %557
        %559 = vset.pattern.permute.xlu0 0
        %560 = vperm.xlu0 %559, %v467
        %v561 = vpop.permute.xlu0 %560
        %562 = vset.pattern.permute.xlu0 0
        %563 = vperm.xlu0 %562, %v468
        %v564 = vpop.permute.xlu0 %563
        %565 = vset.pattern.permute.xlu0 0
        %566 = vperm.xlu0 %565, %v469
        %v567 = vpop.permute.xlu0 %566
        %568 = vset.pattern.permute.xlu0 0
        %569 = vperm.xlu0 %568, %v470
        %v570 = vpop.permute.xlu0 %569
        %571 = vset.pattern.permute.xlu0 0
        %572 = vperm.xlu0 %571, %v471
        %v573 = vpop.permute.xlu0 %572
        %574 = vset.pattern.permute.xlu0 0
        %575 = vperm.xlu0 %574, %v472
        %v576 = vpop.permute.xlu0 %575
        %577 = vset.pattern.permute.xlu0 0
        %578 = vperm.xlu0 %577, %v473
        %v579 = vpop.permute.xlu0 %578
        %580 = vset.pattern.permute.xlu0 0
        %581 = vperm.xlu0 %580, %v474
        %v582 = vpop.permute.xlu0 %581
        %583 = vset.pattern.permute.xlu0 0
        %584 = vperm.xlu0 %583, %v475
        %v585 = vpop.permute.xlu0 %584
        %586 = vset.pattern.permute.xlu0 0
        %587 = vperm.xlu0 %586, %v476
        %v588 = vpop.permute.xlu0 %587
        %589 = vset.pattern.permute.xlu0 0
        %590 = vperm.xlu0 %589, %v477
        %v591 = vpop.permute.xlu0 %590
        %592 = vset.pattern.permute.xlu0 0
        %593 = vperm.xlu0 %592, %v478
        %v594 = vpop.permute.xlu0 %593
        %595 = vset.pattern.permute.xlu0 0
        %596 = vperm.xlu0 %595, %v479
        %v597 = vpop.permute.xlu0 %596
        %598 = vset.pattern.permute.xlu0 0
        %599 = vperm.xlu0 %598, %v480
        %v600 = vpop.permute.xlu0 %599
        %601 = vset.pattern.permute.xlu0 0
        %602 = vperm.xlu0 %601, %v481
        %v603 = vpop.permute.xlu0 %602
        %604 = vset.pattern.permute.xlu0 0
        %605 = vperm.xlu0 %604, %v482
        %v606 = vpop.permute.xlu0 %605
        %607 = vset.pattern.permute.xlu0 0
        %608 = vperm.xlu0 %607, %v483
        %v609 = vpop.permute.xlu0 %608
        %610 = vset.pattern.permute.xlu0 0
        %611 = vperm.xlu0 %610, %v484
        %v612 = vpop.permute.xlu0 %611
        %v613 = vlaneseq
        %v614 = vand.u32 %v613, 127
        %v615 = vlaneseq
        %v616 = vshrl.u32 %v615, 7
        %v617 = vsub.s32 %v614, %v616
        %v618 = vrot.slane %v519, %v617
        %v619 = vadd.s32 %v614, 4294967288
        %v620 = vlaneseq
        %v621 = vshrl.u32 %v620, 7
        %v622 = vsub.s32 %v619, %v621
        %v623 = vrot.slane %v522, %v622
        %vm624 = vcmask 130112
        %v625 = vsel %vm624, %v623, %v618
        %v626 = vadd.s32 %v614, 4294967280
        %v627 = vlaneseq
        %v628 = vshrl.u32 %v627, 7
        %v629 = vsub.s32 %v626, %v628
        %v630 = vrot.slane %v525, %v629
        %vm631 = vcmask 195712
        %v632 = vsel %vm631, %v630, %v625
        %v633 = vadd.s32 %v614, 4294967272
        %v634 = vlaneseq
        %v635 = vshrl.u32 %v634, 7
        %v636 = vsub.s32 %v633, %v635
        %v637 = vrot.slane %v528, %v636
        %vm638 = vcmask 261312
        %v639 = vsel %vm638, %v637, %v632
        %v640 = vlaneseq
        %v641 = vshrl.u32 %v640, 7
        %v642 = vsub.s32 %v614, %v641
        %v643 = vrot.slane %v531, %v642
        %v644 = vlaneseq
        %v645 = vshrl.u32 %v644, 7
        %v646 = vsub.s32 %v619, %v645
        %v647 = vrot.slane %v534, %v646
        %v648 = vsel %vm624, %v647, %v643
        %v649 = vlaneseq
        %v650 = vshrl.u32 %v649, 7
        %v651 = vsub.s32 %v626, %v650
        %v652 = vrot.slane %v537, %v651
        %v653 = vsel %vm631, %v652, %v648
        %v654 = vlaneseq
        %v655 = vshrl.u32 %v654, 7
        %v656 = vsub.s32 %v633, %v655
        %v657 = vrot.slane %v540, %v656
        %v658 = vsel %vm638, %v657, %v653
        %v659 = vlaneseq
        %v660 = vshrl.u32 %v659, 7
        %v661 = vsub.s32 %v614, %v660
        %v662 = vrot.slane %v543, %v661
        %v663 = vlaneseq
        %v664 = vshrl.u32 %v663, 7
        %v665 = vsub.s32 %v619, %v664
        %v666 = vrot.slane %v546, %v665
        %v667 = vsel %vm624, %v666, %v662
        %v668 = vlaneseq
        %v669 = vshrl.u32 %v668, 7
        %v670 = vsub.s32 %v626, %v669
        %v671 = vrot.slane %v549, %v670
        %v672 = vsel %vm631, %v671, %v667
        %v673 = vlaneseq
        %v674 = vshrl.u32 %v673, 7
        %v675 = vsub.s32 %v633, %v674
        %v676 = vrot.slane %v552, %v675
        %v677 = vsel %vm638, %v676, %v672
        %v678 = vlaneseq
        %v679 = vshrl.u32 %v678, 7
        %v680 = vsub.s32 %v614, %v679
        %v681 = vrot.slane %v555, %v680
        %v682 = vlaneseq
        %v683 = vshrl.u32 %v682, 7
        %v684 = vsub.s32 %v619, %v683
        %v685 = vrot.slane %v558, %v684
        %v686 = vsel %vm624, %v685, %v681
        %v687 = vlaneseq
        %v688 = vshrl.u32 %v687, 7
        %v689 = vsub.s32 %v626, %v688
        %v690 = vrot.slane %v561, %v689
        %v691 = vsel %vm631, %v690, %v686
        %v692 = vlaneseq
        %v693 = vshrl.u32 %v692, 7
        %v694 = vsub.s32 %v633, %v693
        %v695 = vrot.slane %v564, %v694
        %v696 = vsel %vm638, %v695, %v691
        %v697 = vlaneseq
        %v698 = vshrl.u32 %v697, 7
        %v699 = vsub.s32 %v614, %v698
        %v700 = vrot.slane %v567, %v699
        %v701 = vlaneseq
        %v702 = vshrl.u32 %v701, 7
        %v703 = vsub.s32 %v619, %v702
        %v704 = vrot.slane %v570, %v703
        %v705 = vsel %vm624, %v704, %v700
        %v706 = vlaneseq
        %v707 = vshrl.u32 %v706, 7
        %v708 = vsub.s32 %v626, %v707
        %v709 = vrot.slane %v573, %v708
        %v710 = vsel %vm631, %v709, %v705
        %v711 = vlaneseq
        %v712 = vshrl.u32 %v711, 7
        %v713 = vsub.s32 %v633, %v712
        %v714 = vrot.slane %v576, %v713
        %v715 = vsel %vm638, %v714, %v710
        %v716 = vlaneseq
        %v717 = vshrl.u32 %v716, 7
        %v718 = vsub.s32 %v614, %v717
        %v719 = vrot.slane %v579, %v718
        %v720 = vlaneseq
        %v721 = vshrl.u32 %v720, 7
        %v722 = vsub.s32 %v619, %v721
        %v723 = vrot.slane %v582, %v722
        %v724 = vsel %vm624, %v723, %v719
        %v725 = vlaneseq
        %v726 = vshrl.u32 %v725, 7
        %v727 = vsub.s32 %v626, %v726
        %v728 = vrot.slane %v585, %v727
        %v729 = vsel %vm631, %v728, %v724
        %v730 = vlaneseq
        %v731 = vshrl.u32 %v730, 7
        %v732 = vsub.s32 %v633, %v731
        %v733 = vrot.slane %v588, %v732
        %v734 = vsel %vm638, %v733, %v729
        %v735 = vlaneseq
        %v736 = vshrl.u32 %v735, 7
        %v737 = vsub.s32 %v614, %v736
        %v738 = vrot.slane %v591, %v737
        %v739 = vlaneseq
        %v740 = vshrl.u32 %v739, 7
        %v741 = vsub.s32 %v619, %v740
        %v742 = vrot.slane %v594, %v741
        %v743 = vsel %vm624, %v742, %v738
        %v744 = vlaneseq
        %v745 = vshrl.u32 %v744, 7
        %v746 = vsub.s32 %v626, %v745
        %v747 = vrot.slane %v597, %v746
        %v748 = vsel %vm631, %v747, %v743
        %v749 = vlaneseq
        %v750 = vshrl.u32 %v749, 7
        %v751 = vsub.s32 %v633, %v750
        %v752 = vrot.slane %v600, %v751
        %v753 = vsel %vm638, %v752, %v748
        %v754 = vlaneseq
        %v755 = vshrl.u32 %v754, 7
        %v756 = vsub.s32 %v614, %v755
        %v757 = vrot.slane %v603, %v756
        %v758 = vlaneseq
        %v759 = vshrl.u32 %v758, 7
        %v760 = vsub.s32 %v619, %v759
        %v761 = vrot.slane %v606, %v760
        %v762 = vsel %vm624, %v761, %v757
        %v763 = vlaneseq
        %v764 = vshrl.u32 %v763, 7
        %v765 = vsub.s32 %v626, %v764
        %v766 = vrot.slane %v609, %v765
        %v767 = vsel %vm631, %v766, %v762
        %v768 = vlaneseq
        %v769 = vshrl.u32 %v768, 7
        %v770 = vsub.s32 %v633, %v769
        %v771 = vrot.slane %v612, %v770
        %v772 = vsel %vm638, %v771, %v767
        %vm773 = vcmask 1041409
        %v774 = vsel %vm773, %v658, %v639
        %vm775 = vcmask 1042434
        %v776 = vsel %vm775, %v677, %v774
        %vm777 = vcmask 1043459
        %v778 = vsel %vm777, %v696, %v776
        %vm779 = vcmask 1044484
        %v780 = vsel %vm779, %v715, %v778
        %vm781 = vcmask 1045509
        %v782 = vsel %vm781, %v734, %v780
        %vm783 = vcmask 1046534
        %v784 = vsel %vm783, %v753, %v782
        %vm785 = vcmask 1047559
        %v786 = vsel %vm785, %v772, %v784
        %vm788 = vcmask 261120
        %v789 = vsel %vm788, %v786, 0.0
        %790 = vadd.xlane.f32.xlu0 %v789
        %v791 = vpop.xlane.xlu0 %790
        %v792 = vld [vmem:[%s2] sm:$0x1]
        %v794 = vlaneseq
        %v795 = vshrl.u32 %v794, 7
        %v796 = vsub.s32 0, %v795
        %v797 = vrot.slane %v792, %v796
        %799 = vbcast.lane.b32.xlu0 %v797, 256
        %v800 = vpop.permute.xlu0 %799
        %v802 = vadd.f32 %v791, %v800
        %v803 = vmax.f32 %v802, 0.0
        %v804 = vld [vmem:[%s3] sm:$0xff]
        %v805 = vld [vmem:[%s3 + $0x8] sm:$0xff]
        %v806 = vld [vmem:[%s3 + $0x10] sm:$0xff]
        %v807 = vld [vmem:[%s3 + $0x18] sm:$0xff]
        %v812 = vlaneseq
        %v813 = vshrl.u32 %v812, 7
        %v814 = vsub.s32 0, %v813
        %v815 = vrot.slane %v804, %v814
        %817 = vbcast.lane.b32.xlu0 %v815, 256
        %v818 = vpop.permute.xlu0 %817
        %v819 = vlaneseq
        %v820 = vshrl.u32 %v819, 7
        %v821 = vsub.s32 1, %v820
        %v822 = vrot.slane %v804, %v821
        %824 = vbcast.lane.b32.xlu0 %v822, 256
        %v825 = vpop.permute.xlu0 %824
        %v826 = vlaneseq
        %v827 = vshrl.u32 %v826, 7
        %v828 = vsub.s32 2, %v827
        %v829 = vrot.slane %v804, %v828
        %831 = vbcast.lane.b32.xlu0 %v829, 256
        %v832 = vpop.permute.xlu0 %831
        %v833 = vlaneseq
        %v834 = vshrl.u32 %v833, 7
        %v835 = vsub.s32 3, %v834
        %v836 = vrot.slane %v804, %v835
        %838 = vbcast.lane.b32.xlu0 %v836, 256
        %v839 = vpop.permute.xlu0 %838
        %v840 = vlaneseq
        %v841 = vshrl.u32 %v840, 7
        %v842 = vsub.s32 4, %v841
        %v843 = vrot.slane %v804, %v842
        %845 = vbcast.lane.b32.xlu0 %v843, 256
        %v846 = vpop.permute.xlu0 %845
        %v847 = vlaneseq
        %v848 = vshrl.u32 %v847, 7
        %v849 = vsub.s32 5, %v848
        %v850 = vrot.slane %v804, %v849
        %852 = vbcast.lane.b32.xlu0 %v850, 256
        %v853 = vpop.permute.xlu0 %852
        %v854 = vlaneseq
        %v855 = vshrl.u32 %v854, 7
        %v856 = vsub.s32 6, %v855
        %v857 = vrot.slane %v804, %v856
        %859 = vbcast.lane.b32.xlu0 %v857, 256
        %v860 = vpop.permute.xlu0 %859
        %v861 = vlaneseq
        %v862 = vshrl.u32 %v861, 7
        %v863 = vsub.s32 7, %v862
        %v864 = vrot.slane %v804, %v863
        %866 = vbcast.lane.b32.xlu0 %v864, 256
        %v867 = vpop.permute.xlu0 %866
        %v868 = vlaneseq
        %v869 = vshrl.u32 %v868, 7
        %v870 = vsub.s32 0, %v869
        %v871 = vrot.slane %v805, %v870
        %873 = vbcast.lane.b32.xlu0 %v871, 256
        %v874 = vpop.permute.xlu0 %873
        %v875 = vlaneseq
        %v876 = vshrl.u32 %v875, 7
        %v877 = vsub.s32 1, %v876
        %v878 = vrot.slane %v805, %v877
        %880 = vbcast.lane.b32.xlu0 %v878, 256
        %v881 = vpop.permute.xlu0 %880
        %v882 = vlaneseq
        %v883 = vshrl.u32 %v882, 7
        %v884 = vsub.s32 2, %v883
        %v885 = vrot.slane %v805, %v884
        %887 = vbcast.lane.b32.xlu0 %v885, 256
        %v888 = vpop.permute.xlu0 %887
        %v889 = vlaneseq
        %v890 = vshrl.u32 %v889, 7
        %v891 = vsub.s32 3, %v890
        %v892 = vrot.slane %v805, %v891
        %894 = vbcast.lane.b32.xlu0 %v892, 256
        %v895 = vpop.permute.xlu0 %894
        %v896 = vlaneseq
        %v897 = vshrl.u32 %v896, 7
        %v898 = vsub.s32 4, %v897
        %v899 = vrot.slane %v805, %v898
        %901 = vbcast.lane.b32.xlu0 %v899, 256
        %v902 = vpop.permute.xlu0 %901
        %v903 = vlaneseq
        %v904 = vshrl.u32 %v903, 7
        %v905 = vsub.s32 5, %v904
        %v906 = vrot.slane %v805, %v905
        %908 = vbcast.lane.b32.xlu0 %v906, 256
        %v909 = vpop.permute.xlu0 %908
        %v910 = vlaneseq
        %v911 = vshrl.u32 %v910, 7
        %v912 = vsub.s32 6, %v911
        %v913 = vrot.slane %v805, %v912
        %915 = vbcast.lane.b32.xlu0 %v913, 256
        %v916 = vpop.permute.xlu0 %915
        %v917 = vlaneseq
        %v918 = vshrl.u32 %v917, 7
        %v919 = vsub.s32 7, %v918
        %v920 = vrot.slane %v805, %v919
        %922 = vbcast.lane.b32.xlu0 %v920, 256
        %v923 = vpop.permute.xlu0 %922
        %v924 = vlaneseq
        %v925 = vshrl.u32 %v924, 7
        %v926 = vsub.s32 0, %v925
        %v927 = vrot.slane %v806, %v926
        %929 = vbcast.lane.b32.xlu0 %v927, 256
        %v930 = vpop.permute.xlu0 %929
        %v931 = vlaneseq
        %v932 = vshrl.u32 %v931, 7
        %v933 = vsub.s32 1, %v932
        %v934 = vrot.slane %v806, %v933
        %936 = vbcast.lane.b32.xlu0 %v934, 256
        %v937 = vpop.permute.xlu0 %936
        %v938 = vlaneseq
        %v939 = vshrl.u32 %v938, 7
        %v940 = vsub.s32 2, %v939
        %v941 = vrot.slane %v806, %v940
        %943 = vbcast.lane.b32.xlu0 %v941, 256
        %v944 = vpop.permute.xlu0 %943
        %v945 = vlaneseq
        %v946 = vshrl.u32 %v945, 7
        %v947 = vsub.s32 3, %v946
        %v948 = vrot.slane %v806, %v947
        %950 = vbcast.lane.b32.xlu0 %v948, 256
        %v951 = vpop.permute.xlu0 %950
        %v952 = vlaneseq
        %v953 = vshrl.u32 %v952, 7
        %v954 = vsub.s32 4, %v953
        %v955 = vrot.slane %v806, %v954
        %957 = vbcast.lane.b32.xlu0 %v955, 256
        %v958 = vpop.permute.xlu0 %957
        %v959 = vlaneseq
        %v960 = vshrl.u32 %v959, 7
        %v961 = vsub.s32 5, %v960
        %v962 = vrot.slane %v806, %v961
        %964 = vbcast.lane.b32.xlu0 %v962, 256
        %v965 = vpop.permute.xlu0 %964
        %v966 = vlaneseq
        %v967 = vshrl.u32 %v966, 7
        %v968 = vsub.s32 6, %v967
        %v969 = vrot.slane %v806, %v968
        %971 = vbcast.lane.b32.xlu0 %v969, 256
        %v972 = vpop.permute.xlu0 %971
        %v973 = vlaneseq
        %v974 = vshrl.u32 %v973, 7
        %v975 = vsub.s32 7, %v974
        %v976 = vrot.slane %v806, %v975
        %978 = vbcast.lane.b32.xlu0 %v976, 256
        %v979 = vpop.permute.xlu0 %978
        %v980 = vlaneseq
        %v981 = vshrl.u32 %v980, 7
        %v982 = vsub.s32 0, %v981
        %v983 = vrot.slane %v807, %v982
        %985 = vbcast.lane.b32.xlu0 %v983, 256
        %v986 = vpop.permute.xlu0 %985
        %v987 = vlaneseq
        %v988 = vshrl.u32 %v987, 7
        %v989 = vsub.s32 1, %v988
        %v990 = vrot.slane %v807, %v989
        %992 = vbcast.lane.b32.xlu0 %v990, 256
        %v993 = vpop.permute.xlu0 %992
        %v994 = vlaneseq
        %v995 = vshrl.u32 %v994, 7
        %v996 = vsub.s32 2, %v995
        %v997 = vrot.slane %v807, %v996
        %999 = vbcast.lane.b32.xlu0 %v997, 256
        %v1000 = vpop.permute.xlu0 %999
        %v1001 = vlaneseq
        %v1002 = vshrl.u32 %v1001, 7
        %v1003 = vsub.s32 3, %v1002
        %v1004 = vrot.slane %v807, %v1003
        %1006 = vbcast.lane.b32.xlu0 %v1004, 256
        %v1007 = vpop.permute.xlu0 %1006
        %v1008 = vlaneseq
        %v1009 = vshrl.u32 %v1008, 7
        %v1010 = vsub.s32 4, %v1009
        %v1011 = vrot.slane %v807, %v1010
        %1013 = vbcast.lane.b32.xlu0 %v1011, 256
        %v1014 = vpop.permute.xlu0 %1013
        %v1015 = vlaneseq
        %v1016 = vshrl.u32 %v1015, 7
        %v1017 = vsub.s32 5, %v1016
        %v1018 = vrot.slane %v807, %v1017
        %1020 = vbcast.lane.b32.xlu0 %v1018, 256
        %v1021 = vpop.permute.xlu0 %1020
        %v1022 = vlaneseq
        %v1023 = vshrl.u32 %v1022, 7
        %v1024 = vsub.s32 6, %v1023
        %v1025 = vrot.slane %v807, %v1024
        %1027 = vbcast.lane.b32.xlu0 %v1025, 256
        %v1028 = vpop.permute.xlu0 %1027
        %v1029 = vlaneseq
        %v1030 = vshrl.u32 %v1029, 7
        %v1031 = vsub.s32 7, %v1030
        %v1032 = vrot.slane %v807, %v1031
        %1034 = vbcast.lane.b32.xlu0 %v1032, 256
        %v1035 = vpop.permute.xlu0 %1034
        %v1068 = vmul.f32 %v803, %v818
        %v1069 = vmul.f32 %v803, %v825
        %v1070 = vmul.f32 %v803, %v832
        %v1071 = vmul.f32 %v803, %v839
        %v1072 = vmul.f32 %v803, %v846
        %v1073 = vmul.f32 %v803, %v853
        %v1074 = vmul.f32 %v803, %v860
        %v1075 = vmul.f32 %v803, %v867
        %v1076 = vmul.f32 %v803, %v874
        %v1077 = vmul.f32 %v803, %v881
        %v1078 = vmul.f32 %v803, %v888
        %v1079 = vmul.f32 %v803, %v895
        %v1080 = vmul.f32 %v803, %v902
        %v1081 = vmul.f32 %v803, %v909
        %v1082 = vmul.f32 %v803, %v916
        %v1083 = vmul.f32 %v803, %v923
        %v1084 = vmul.f32 %v803, %v930
        %v1085 = vmul.f32 %v803, %v937
        %v1086 = vmul.f32 %v803, %v944
        %v1087 = vmul.f32 %v803, %v951
        %v1088 = vmul.f32 %v803, %v958
        %v1089 = vmul.f32 %v803, %v965
        %v1090 = vmul.f32 %v803, %v972
        %v1091 = vmul.f32 %v803, %v979
        %v1092 = vmul.f32 %v803, %v986
        %v1093 = vmul.f32 %v803, %v993
        %v1094 = vmul.f32 %v803, %v1000
        %v1095 = vmul.f32 %v803, %v1007
        %v1096 = vmul.f32 %v803, %v1014
        %v1097 = vmul.f32 %v803, %v1021
        %v1098 = vmul.f32 %v803, %v1028
        %v1099 = vmul.f32 %v803, %v1035
        %1132 = vset.pattern.permute.xlu0 0
        %1133 = vperm.xlu0 %1132, %v1068
        %v1134 = vpop.permute.xlu0 %1133
        %1135 = vset.pattern.permute.xlu0 0
        %1136 = vperm.xlu0 %1135, %v1069
        %v1137 = vpop.permute.xlu0 %1136
        %1138 = vset.pattern.permute.xlu0 0
        %1139 = vperm.xlu0 %1138, %v1070
        %v1140 = vpop.permute.xlu0 %1139
        %1141 = vset.pattern.permute.xlu0 0
        %1142 = vperm.xlu0 %1141, %v1071
        %v1143 = vpop.permute.xlu0 %1142
        %1144 = vset.pattern.permute.xlu0 0
        %1145 = vperm.xlu0 %1144, %v1072
        %v1146 = vpop.permute.xlu0 %1145
        %1147 = vset.pattern.permute.xlu0 0
        %1148 = vperm.xlu0 %1147, %v1073
        %v1149 = vpop.permute.xlu0 %1148
        %1150 = vset.pattern.permute.xlu0 0
        %1151 = vperm.xlu0 %1150, %v1074
        %v1152 = vpop.permute.xlu0 %1151
        %1153 = vset.pattern.permute.xlu0 0
        %1154 = vperm.xlu0 %1153, %v1075
        %v1155 = vpop.permute.xlu0 %1154
        %1156 = vset.pattern.permute.xlu0 0
        %1157 = vperm.xlu0 %1156, %v1076
        %v1158 = vpop.permute.xlu0 %1157
        %1159 = vset.pattern.permute.xlu0 0
        %1160 = vperm.xlu0 %1159, %v1077
        %v1161 = vpop.permute.xlu0 %1160
        %1162 = vset.pattern.permute.xlu0 0
        %1163 = vperm.xlu0 %1162, %v1078
        %v1164 = vpop.permute.xlu0 %1163
        %1165 = vset.pattern.permute.xlu0 0
        %1166 = vperm.xlu0 %1165, %v1079
        %v1167 = vpop.permute.xlu0 %1166
        %1168 = vset.pattern.permute.xlu0 0
        %1169 = vperm.xlu0 %1168, %v1080
        %v1170 = vpop.permute.xlu0 %1169
        %1171 = vset.pattern.permute.xlu0 0
        %1172 = vperm.xlu0 %1171, %v1081
        %v1173 = vpop.permute.xlu0 %1172
        %1174 = vset.pattern.permute.xlu0 0
        %1175 = vperm.xlu0 %1174, %v1082
        %v1176 = vpop.permute.xlu0 %1175
        %1177 = vset.pattern.permute.xlu0 0
        %1178 = vperm.xlu0 %1177, %v1083
        %v1179 = vpop.permute.xlu0 %1178
        %1180 = vset.pattern.permute.xlu0 0
        %1181 = vperm.xlu0 %1180, %v1084
        %v1182 = vpop.permute.xlu0 %1181
        %1183 = vset.pattern.permute.xlu0 0
        %1184 = vperm.xlu0 %1183, %v1085
        %v1185 = vpop.permute.xlu0 %1184
        %1186 = vset.pattern.permute.xlu0 0
        %1187 = vperm.xlu0 %1186, %v1086
        %v1188 = vpop.permute.xlu0 %1187
        %1189 = vset.pattern.permute.xlu0 0
        %1190 = vperm.xlu0 %1189, %v1087
        %v1191 = vpop.permute.xlu0 %1190
        %1192 = vset.pattern.permute.xlu0 0
        %1193 = vperm.xlu0 %1192, %v1088
        %v1194 = vpop.permute.xlu0 %1193
        %1195 = vset.pattern.permute.xlu0 0
        %1196 = vperm.xlu0 %1195, %v1089
        %v1197 = vpop.permute.xlu0 %1196
        %1198 = vset.pattern.permute.xlu0 0
        %1199 = vperm.xlu0 %1198, %v1090
        %v1200 = vpop.permute.xlu0 %1199
        %1201 = vset.pattern.permute.xlu0 0
        %1202 = vperm.xlu0 %1201, %v1091
        %v1203 = vpop.permute.xlu0 %1202
        %1204 = vset.pattern.permute.xlu0 0
        %1205 = vperm.xlu0 %1204, %v1092
        %v1206 = vpop.permute.xlu0 %1205
        %1207 = vset.pattern.permute.xlu0 0
        %1208 = vperm.xlu0 %1207, %v1093
        %v1209 = vpop.permute.xlu0 %1208
        %1210 = vset.pattern.permute.xlu0 0
        %1211 = vperm.xlu0 %1210, %v1094
        %v1212 = vpop.permute.xlu0 %1211
        %1213 = vset.pattern.permute.xlu0 0
        %1214 = vperm.xlu0 %1213, %v1095
        %v1215 = vpop.permute.xlu0 %1214
        %1216 = vset.pattern.permute.xlu0 0
        %1217 = vperm.xlu0 %1216, %v1096
        %v1218 = vpop.permute.xlu0 %1217
        %1219 = vset.pattern.permute.xlu0 0
        %1220 = vperm.xlu0 %1219, %v1097
        %v1221 = vpop.permute.xlu0 %1220
        %1222 = vset.pattern.permute.xlu0 0
        %1223 = vperm.xlu0 %1222, %v1098
        %v1224 = vpop.permute.xlu0 %1223
        %1225 = vset.pattern.permute.xlu0 0
        %1226 = vperm.xlu0 %1225, %v1099
        %v1227 = vpop.permute.xlu0 %1226
        %v1228 = vlaneseq
        %v1229 = vshrl.u32 %v1228, 7
        %v1230 = vsub.s32 %v614, %v1229
        %v1231 = vrot.slane %v1134, %v1230
        %v1232 = vlaneseq
        %v1233 = vshrl.u32 %v1232, 7
        %v1234 = vsub.s32 %v614, %v1233
        %v1235 = vrot.slane %v1137, %v1234
        %v1236 = vlaneseq
        %v1237 = vshrl.u32 %v1236, 7
        %v1238 = vsub.s32 %v614, %v1237
        %v1239 = vrot.slane %v1140, %v1238
        %v1240 = vlaneseq
        %v1241 = vshrl.u32 %v1240, 7
        %v1242 = vsub.s32 %v614, %v1241
        %v1243 = vrot.slane %v1143, %v1242
        %v1244 = vlaneseq
        %v1245 = vshrl.u32 %v1244, 7
        %v1246 = vsub.s32 %v614, %v1245
        %v1247 = vrot.slane %v1146, %v1246
        %v1248 = vlaneseq
        %v1249 = vshrl.u32 %v1248, 7
        %v1250 = vsub.s32 %v614, %v1249
        %v1251 = vrot.slane %v1149, %v1250
        %v1252 = vlaneseq
        %v1253 = vshrl.u32 %v1252, 7
        %v1254 = vsub.s32 %v614, %v1253
        %v1255 = vrot.slane %v1152, %v1254
        %v1256 = vlaneseq
        %v1257 = vshrl.u32 %v1256, 7
        %v1258 = vsub.s32 %v614, %v1257
        %v1259 = vrot.slane %v1155, %v1258
        %v1260 = vlaneseq
        %v1261 = vshrl.u32 %v1260, 7
        %v1262 = vsub.s32 %v614, %v1261
        %v1263 = vrot.slane %v1158, %v1262
        %v1264 = vlaneseq
        %v1265 = vshrl.u32 %v1264, 7
        %v1266 = vsub.s32 %v614, %v1265
        %v1267 = vrot.slane %v1161, %v1266
        %v1268 = vlaneseq
        %v1269 = vshrl.u32 %v1268, 7
        %v1270 = vsub.s32 %v614, %v1269
        %v1271 = vrot.slane %v1164, %v1270
        %v1272 = vlaneseq
        %v1273 = vshrl.u32 %v1272, 7
        %v1274 = vsub.s32 %v614, %v1273
        %v1275 = vrot.slane %v1167, %v1274
        %v1276 = vlaneseq
        %v1277 = vshrl.u32 %v1276, 7
        %v1278 = vsub.s32 %v614, %v1277
        %v1279 = vrot.slane %v1170, %v1278
        %v1280 = vlaneseq
        %v1281 = vshrl.u32 %v1280, 7
        %v1282 = vsub.s32 %v614, %v1281
        %v1283 = vrot.slane %v1173, %v1282
        %v1284 = vlaneseq
        %v1285 = vshrl.u32 %v1284, 7
        %v1286 = vsub.s32 %v614, %v1285
        %v1287 = vrot.slane %v1176, %v1286
        %v1288 = vlaneseq
        %v1289 = vshrl.u32 %v1288, 7
        %v1290 = vsub.s32 %v614, %v1289
        %v1291 = vrot.slane %v1179, %v1290
        %v1292 = vlaneseq
        %v1293 = vshrl.u32 %v1292, 7
        %v1294 = vsub.s32 %v614, %v1293
        %v1295 = vrot.slane %v1182, %v1294
        %v1296 = vlaneseq
        %v1297 = vshrl.u32 %v1296, 7
        %v1298 = vsub.s32 %v614, %v1297
        %v1299 = vrot.slane %v1185, %v1298
        %v1300 = vlaneseq
        %v1301 = vshrl.u32 %v1300, 7
        %v1302 = vsub.s32 %v614, %v1301
        %v1303 = vrot.slane %v1188, %v1302
        %v1304 = vlaneseq
        %v1305 = vshrl.u32 %v1304, 7
        %v1306 = vsub.s32 %v614, %v1305
        %v1307 = vrot.slane %v1191, %v1306
        %v1308 = vlaneseq
        %v1309 = vshrl.u32 %v1308, 7
        %v1310 = vsub.s32 %v614, %v1309
        %v1311 = vrot.slane %v1194, %v1310
        %v1312 = vlaneseq
        %v1313 = vshrl.u32 %v1312, 7
        %v1314 = vsub.s32 %v614, %v1313
        %v1315 = vrot.slane %v1197, %v1314
        %v1316 = vlaneseq
        %v1317 = vshrl.u32 %v1316, 7
        %v1318 = vsub.s32 %v614, %v1317
        %v1319 = vrot.slane %v1200, %v1318
        %v1320 = vlaneseq
        %v1321 = vshrl.u32 %v1320, 7
        %v1322 = vsub.s32 %v614, %v1321
        %v1323 = vrot.slane %v1203, %v1322
        %v1324 = vlaneseq
        %v1325 = vshrl.u32 %v1324, 7
        %v1326 = vsub.s32 %v614, %v1325
        %v1327 = vrot.slane %v1206, %v1326
        %v1328 = vlaneseq
        %v1329 = vshrl.u32 %v1328, 7
        %v1330 = vsub.s32 %v614, %v1329
        %v1331 = vrot.slane %v1209, %v1330
        %v1332 = vlaneseq
        %v1333 = vshrl.u32 %v1332, 7
        %v1334 = vsub.s32 %v614, %v1333
        %v1335 = vrot.slane %v1212, %v1334
        %v1336 = vlaneseq
        %v1337 = vshrl.u32 %v1336, 7
        %v1338 = vsub.s32 %v614, %v1337
        %v1339 = vrot.slane %v1215, %v1338
        %v1340 = vlaneseq
        %v1341 = vshrl.u32 %v1340, 7
        %v1342 = vsub.s32 %v614, %v1341
        %v1343 = vrot.slane %v1218, %v1342
        %v1344 = vlaneseq
        %v1345 = vshrl.u32 %v1344, 7
        %v1346 = vsub.s32 %v614, %v1345
        %v1347 = vrot.slane %v1221, %v1346
        %v1348 = vlaneseq
        %v1349 = vshrl.u32 %v1348, 7
        %v1350 = vsub.s32 %v614, %v1349
        %v1351 = vrot.slane %v1224, %v1350
        %v1352 = vlaneseq
        %v1353 = vshrl.u32 %v1352, 7
        %v1354 = vsub.s32 %v614, %v1353
        %v1355 = vrot.slane %v1227, %v1354
        %v1356 = vsel %vm773, %v1235, %v1231
        %v1357 = vsel %vm775, %v1239, %v1356
        %v1358 = vsel %vm777, %v1243, %v1357
        %v1359 = vsel %vm779, %v1247, %v1358
        %v1360 = vsel %vm781, %v1251, %v1359
        %v1361 = vsel %vm783, %v1255, %v1360
        %v1362 = vsel %vm785, %v1259, %v1361
        %v1363 = vsel %vm773, %v1267, %v1263
        %v1364 = vsel %vm775, %v1271, %v1363
        %v1365 = vsel %vm777, %v1275, %v1364
        %v1366 = vsel %vm779, %v1279, %v1365
        %v1367 = vsel %vm781, %v1283, %v1366
        %v1368 = vsel %vm783, %v1287, %v1367
        %v1369 = vsel %vm785, %v1291, %v1368
        %v1370 = vsel %vm773, %v1299, %v1295
        %v1371 = vsel %vm775, %v1303, %v1370
        %v1372 = vsel %vm777, %v1307, %v1371
        %v1373 = vsel %vm779, %v1311, %v1372
        %v1374 = vsel %vm781, %v1315, %v1373
        %v1375 = vsel %vm783, %v1319, %v1374
        %v1376 = vsel %vm785, %v1323, %v1375
        %v1377 = vsel %vm773, %v1331, %v1327
        %v1378 = vsel %vm775, %v1335, %v1377
        %v1379 = vsel %vm777, %v1339, %v1378
        %v1380 = vsel %vm779, %v1343, %v1379
        %v1381 = vsel %vm781, %v1347, %v1380
        %v1382 = vsel %vm783, %v1351, %v1381
        %v1383 = vsel %vm785, %v1355, %v1382
        %vm1388 = vcmask 64512
        %v1389 = vsel %vm1388, %v1362, 0.0
        %1390 = vadd.xlane.f32.xlu0 %v1389
        %v1391 = vpop.xlane.xlu0 %1390
        %v1392 = vsel %vm1388, %v1369, 0.0
        %1393 = vadd.xlane.f32.xlu0 %v1392
        %v1394 = vpop.xlane.xlu0 %1393
        %v1395 = vsel %vm1388, %v1376, 0.0
        %1396 = vadd.xlane.f32.xlu0 %v1395
        %v1397 = vpop.xlane.xlu0 %1396
        %v1398 = vsel %vm1388, %v1383, 0.0
        %1399 = vadd.xlane.f32.xlu0 %v1398
        %v1400 = vpop.xlane.xlu0 %1399
        %v1401 = vld [vmem:[%s4] sm:$0x1]
        %v1403 = vlaneseq
        %v1404 = vshrl.u32 %v1403, 7
        %v1405 = vsub.s32 0, %v1404
        %v1406 = vrot.slane %v1401, %v1405
        %1408 = vbcast.lane.b32.xlu0 %v1406, 256
        %v1409 = vpop.permute.xlu0 %1408
        %s1411 = sor.u32 256, 8
        %1412 = vbcast.lane.b32.xlu0 %v1406, %s1411
        %v1413 = vpop.permute.xlu0 %1412
        %s1415 = sor.u32 256, 16
        %1416 = vbcast.lane.b32.xlu0 %v1406, %s1415
        %v1417 = vpop.permute.xlu0 %1416
        %s1419 = sor.u32 256, 24
        %1420 = vbcast.lane.b32.xlu0 %v1406, %s1419
        %v1421 = vpop.permute.xlu0 %1420
        %v1426 = vadd.f32 %v1391, %v1409
        %v1427 = vadd.f32 %v1394, %v1413
        %v1428 = vadd.f32 %v1397, %v1417
        %v1429 = vadd.f32 %v1400, %v1421
        %v1430 = vadd.f32 %v1426, 3.0
        %v1431 = vadd.f32 %v1427, 3.0
        %v1432 = vadd.f32 %v1428, 3.0
        %v1433 = vadd.f32 %v1429, 3.0
        %v1434 = vmax.f32 %v1430, 0.0
        %v1435 = vmax.f32 %v1431, 0.0
        %v1436 = vmax.f32 %v1432, 0.0
        %v1437 = vmax.f32 %v1433, 0.0
        %v1438 = vmin.f32 %v1434, 6.0
        %v1439 = vmin.f32 %v1435, 6.0
        %v1440 = vmin.f32 %v1436, 6.0
        %v1441 = vmin.f32 %v1437, 6.0
        %v1442 = vmul.f32 %v1438, 0.16666667
        %v1443 = vmul.f32 %v1439, 0.16666667
        %v1444 = vmul.f32 %v1440, 0.16666667
        %v1445 = vmul.f32 %v1441, 0.16666667
        %1447 = vset.pattern.permute.xlu0 0
        %1448 = vperm.xlu0 %1447, %v1442
        %v1449 = vpop.permute.xlu0 %1448
        %1452 = vset.pattern.permute.xlu0 0
        %1453 = vperm.xlu0 %1452, %v1443
        %v1454 = vpop.permute.xlu0 %1453
        %1457 = vset.pattern.permute.xlu0 0
        %1458 = vperm.xlu0 %1457, %v1444
        %v1459 = vpop.permute.xlu0 %1458
        %1462 = vset.pattern.permute.xlu0 0
        %1463 = vperm.xlu0 %1462, %v1445
        %v1464 = vpop.permute.xlu0 %1463
        %v1466 = vmul.f32 %v1449, %v243
        %v1467 = vmul.f32 %v1449, %v244
        %v1468 = vmul.f32 %v1454, %v245
        %v1469 = vmul.f32 %v1454, %v246
        %v1470 = vmul.f32 %v1459, %v247
        %v1471 = vmul.f32 %v1459, %v248
        %v1472 = vmul.f32 %v1464, %v249
        %v1473 = vmul.f32 %v1464, %v250
        %1474 = vst [vmem:[%s242] sm:$0xff] %v1466
        %1475 = vst [vmem:[%s242 + $0x8] sm:$0xff] %v1467
        %1476 = vst [vmem:[%s242 + $0x10] sm:$0xff] %v1468
        %1477 = vst [vmem:[%s242 + $0x18] sm:$0xff] %v1469
        %1478 = vst [vmem:[%s242 + $0x20] sm:$0xff] %v1470
        %1479 = vst [vmem:[%s242 + $0x28] sm:$0xff] %v1471
        %1480 = vst [vmem:[%s242 + $0x30] sm:$0xff] %v1472
        %1481 = vst [vmem:[%s242 + $0x38] sm:$0xff] %v1473
        %s1482 = sand.u32 %s140, 1
        %s1483 = scalar_lea.sflag [#allocation4], %s1482
        %s1484 = sand.u32 %s140, 1
        %s1485 = smul.addr %s1484, 64
        %s1486 = scalar_lea.vmem [#allocation5], %s1485
        // Predicated region
        $region45: #{tpu_custom_call.1} parent=39 // pred_check
          %p1487 = pneg %p150
        $region46: #{tpu_custom_call.1} parent=39 // pred_check_branch
          %1489 = sbr.rel (%p1487) target = $region48
        $region47: #{tpu_custom_call.1} parent=39 // pred_region
          %s1491 = ssub.s32 1024, 1024
          %1492 = vsyncadd %s1483, %s1491
          %s1493 = smul.addr %s22, 8
          %s1494 = smul.addr %s1493, 128
          %s1495 = scalar_lea.hbm %s5, %s1494
          %s1496 = sshll.u32 %s1486, 4
          %s1497 = int_to_ptr.vmem [resolvable:$true] %s1496
          %1502 = dma.vmem_to_hbm [thread:$0]  %s1497, 1024, %s1495, %s1483, 256, 256, 16
        $region48: #{tpu_custom_call.1} parent=39 // pred_fallthru
          _
      $region40: #{tpu_custom_call.1} parent=5 // pred_fallthru
        _
      %p1503 = scmp.le.s32.totalorder 2, %s17
      // Predicated region
      $region49: #{tpu_custom_call.1} parent=5 // pred_check
        %p1504 = pneg %p1503
      $region50: #{tpu_custom_call.1} parent=5 // pred_check_branch
        %1506 = sbr.rel (%p1504) target = $region52
      $region51: #{tpu_custom_call.1} parent=5 // pred_region
        %s1507 = ssub.s32 %s17, 2
        // Predicated region
        $region53: #{tpu_custom_call.1} parent=51 // pred_check
          %p1508 = pneg %p156
        $region54: #{tpu_custom_call.1} parent=51 // pred_check_branch
          %1510 = sbr.rel (%p1508) target = $region56
        $region55: #{tpu_custom_call.1} parent=51 // pred_region
          %s1511 = sand.u32 %s141, 1
          %s1512 = scalar_lea.sflag [#allocation4], %s1511
          %s1513 = sand.u32 %s141, 1
          %s1514 = smul.addr %s1513, 64
          %s1515 = scalar_lea.vmem [#allocation5], %s1514
          %1516 = dma.done %s1512, 1024
        $region56: #{tpu_custom_call.1} parent=51 // pred_fallthru
          _
      $region52: #{tpu_custom_call.1} parent=5 // pred_fallthru
        _
    $region6: #{tpu_custom_call.1} parent=1 // loop_footer
      %s21 = sadd.s32 1, %s17
    $region7: #{tpu_custom_call.1} parent=1 // loop_footer_branch
      %16 = sbr.rel target = $region3
    $region8: #{tpu_custom_call.1} parent=1 // loop_exit
      _
    %1517 = vsyncpa [#allocation3], 1
    %s1518 = scalar_lea.sflag [#allocation3], 1
    %1519 = vsyncpa %s1518, 1
    %1520 = vsyncpa [#allocation4], 1
    %s1521 = scalar_lea.sflag [#allocation4], 1
    %1522 = vsyncpa %s1521, 1

</llo_original>
